<compile_context>
chip_gen: v5e
topology: v5e:2x2
jax: 0.10.0
libtpu: 0.0.40
codegen_flags: <defaults>
</compile_context>

<pallas_src>
import functools

import jax
import jax.numpy as jnp
from jax import lax
from jax.experimental import pallas as pl
from jax.experimental.pallas import tpu as pltpu


_LOG2E = 1.4426950408889634


# ---------------------------------------------------------------------------
# Chip-aware scoped-VMEM budget: ~3/4 of physical VMEM (v5e/v6e 128 MiB -> 96,
# v7x 64 MiB -> 48); conservative 48 MiB fallback if the query is unavailable.
# ---------------------------------------------------------------------------
@functools.lru_cache(maxsize=None)
def _vmem_limit_bytes():
    try:
        cap = getattr(pltpu.get_tpu_info(), "vmem_capacity_bytes", None)
        if cap:
            return int(min(100 * 1024 * 1024, (int(cap) * 3) // 4))
    except Exception:
        pass
    return 48 * 1024 * 1024


def _row_granule(dtype):
    # sublane packing: 8 rows for 32-bit, 16 for bf16, 32 for int8/fp8.
    return 8 * max(1, 4 // jnp.dtype(dtype).itemsize)


def _pick_tile(dim, pref, granule):
    """Largest tile <= pref that divides dim and is a multiple of granule,
    else the full extent (always a legal block shape).  NOTE: the full-extent
    fallback keeps correctness for awkward dims but can exceed the VMEM
    budget; grids assume exact divisibility (no remainder masking)."""
    if dim <= pref:
        return dim
    t = (pref // granule) * granule
    while t >= granule:
        if dim % t == 0:
            return t
        t -= granule
    return dim


# ----------------------------------------------------------------------------
# Tiled linear: y = x @ w_t (+ b), w_t is the pre-transposed (IN, OUT) weight.
# ----------------------------------------------------------------------------
def _linear_kernel(x_ref, w_ref, *rest, has_bias):
    if has_bias:
        b_ref, o_ref, acc_ref = rest
    else:
        o_ref, acc_ref = rest

    @pl.when(pl.program_id(2) == 0)
    def _init():
        acc_ref[...] = jnp.zeros_like(acc_ref)

    acc_ref[...] += jnp.dot(x_ref[...], w_ref[...],
                            preferred_element_type=jnp.float32)

    @pl.when(pl.program_id(2) == pl.num_programs(2) - 1)
    def _finalize():
        acc = acc_ref[...]
        if has_bias:
            acc = acc + b_ref[...].astype(jnp.float32)
        o_ref[...] = acc.astype(o_ref.dtype)


def linear_pallas(x2d, w_t, bias=None, *, tm=512, tn=512, tk=512):
    """y = x2d @ w_t (+ bias); w_t is (IN, OUT) (MXU-native, no transpose)."""
    M, IN = x2d.shape
    IN_w, OUT = w_t.shape
    assert IN == IN_w, (IN, IN_w)

    itemsize = x2d.dtype.itemsize
    TM = _pick_tile(M, tm, _row_granule(x2d.dtype))
    TN = _pick_tile(OUT, tn, 128)
    TK = _pick_tile(IN, tk, 128)
    grid = (M // TM, OUT // TN, IN // TK)

    in_specs = [
        pl.BlockSpec((TM, TK), lambda i, j, k: (i, k)),
        pl.BlockSpec((TK, TN), lambda i, j, k: (k, j)),
    ]
    args = [x2d, w_t]
    has_bias = bias is not None
    if has_bias:
        in_specs.append(pl.BlockSpec((1, TN), lambda i, j, k: (0, j)))
        args.append(bias.reshape(1, OUT))

    return pl.pallas_call(
        functools.partial(_linear_kernel, has_bias=has_bias),
        out_shape=jax.ShapeDtypeStruct((M, OUT), x2d.dtype),
        grid_spec=pltpu.PrefetchScalarGridSpec(
            num_scalar_prefetch=0,
            grid=grid,
            in_specs=in_specs,
            out_specs=pl.BlockSpec((TM, TN), lambda i, j, k: (i, j)),
            scratch_shapes=[pltpu.VMEM((TM, TN), jnp.float32)],
        ),
        compiler_params=pltpu.CompilerParams(
            dimension_semantics=("parallel", "parallel", "arbitrary"),
            vmem_limit_bytes=_vmem_limit_bytes(),
        ),
        cost_estimate=pl.CostEstimate(
            flops=2 * M * OUT * IN, transcendentals=0,
            bytes_accessed=itemsize * (M * IN + OUT * IN + M * OUT
                                       + (OUT if has_bias else 0))),
    )(*args)


# ----------------------------------------------------------------------------
# Fused q|k|v in-projection: qkv = x @ w_in_t, emitted as (3, M, E) slabs so
# the attention kernel reads q/k/v directly (no XLA slice round-trips).
# ----------------------------------------------------------------------------
def _fused_qkv_small_kernel(x_ref, w_ref, o_ref, acc_ref, *, embed_dim):
    @pl.when(pl.program_id(1) == 0)
    def _init():
        acc_ref[...] = jnp.zeros_like(acc_ref)

    acc_ref[...] += jnp.dot(x_ref[...], w_ref[...],
                            preferred_element_type=jnp.float32)

    @pl.when(pl.program_id(1) == pl.num_programs(1) - 1)
    def _finalize():
        acc = acc_ref[...]
        E = embed_dim
        o_ref[0] = acc[:, :E].astype(o_ref.dtype)
        o_ref[1] = acc[:, E:2 * E].astype(o_ref.dtype)
        o_ref[2] = acc[:, 2 * E:].astype(o_ref.dtype)


def fused_qkv_projection(x2d, w_in_t, embed_dim, *, tm=512, tn=512, tk=512):
    M, IN = x2d.shape
    IN_w, OUT3 = w_in_t.shape
    E = embed_dim
    assert IN == IN_w and OUT3 == 3 * E

    itemsize = x2d.dtype.itemsize
    TM = _pick_tile(M, tm, _row_granule(x2d.dtype))
    TK = _pick_tile(IN, tk, 128)
    out_shape = jax.ShapeDtypeStruct((3, M, E), x2d.dtype)
    vmem = _vmem_limit_bytes()
    cost = pl.CostEstimate(
        flops=2 * M * 3 * E * IN, transcendentals=0,
        bytes_accessed=itemsize * (M * IN + 3 * E * IN + 3 * M * E))

    if E % 128 == 0:
        # Lane-tileable E: standard tiled GEMM; the out index_map routes each
        # 128-aligned output-column block to its q/k/v slab.
        TN = _pick_tile(E, tn, 128)
        n_e = E // TN
        grid = (M // TM, 3 * n_e, IN // TK)
        return pl.pallas_call(
            functools.partial(_linear_kernel, has_bias=False),
            out_shape=out_shape,
            grid_spec=pltpu.PrefetchScalarGridSpec(
                num_scalar_prefetch=0,
                grid=grid,
                in_specs=[
                    pl.BlockSpec((TM, TK), lambda i, j, k: (i, k)),
                    pl.BlockSpec((TK, TN), lambda i, j, k: (k, j)),
                ],
                out_specs=pl.BlockSpec(
                    (None, TM, TN), lambda i, j, k: (j // n_e, i, j % n_e)),
                scratch_shapes=[pltpu.VMEM((TM, TN), jnp.float32)],
            ),
            compiler_params=pltpu.CompilerParams(
                dimension_semantics=("parallel", "parallel", "arbitrary"),
                vmem_limit_bytes=vmem,
            ),
            cost_estimate=cost,
        )(x2d, w_in_t)

    # Small / non-128-aligned E: one 3E-wide output-column block per row tile
    # (full last-dim blocks keep the (8,128) rule satisfied); the kernel splits
    # the f32 accumulator into the three slabs at finalize.
    grid = (M // TM, IN // TK)
    return pl.pallas_call(
        functools.partial(_fused_qkv_small_kernel, embed_dim=E),
        out_shape=out_shape,
        grid_spec=pltpu.PrefetchScalarGridSpec(
            num_scalar_prefetch=0,
            grid=grid,
            in_specs=[
                pl.BlockSpec((TM, TK), lambda i, k: (i, k)),
                pl.BlockSpec((TK, 3 * E), lambda i, k: (k, 0)),
            ],
            out_specs=pl.BlockSpec((3, TM, E), lambda i, k: (0, i, 0)),
            scratch_shapes=[pltpu.VMEM((TM, 3 * E), jnp.float32)],
        ),
        compiler_params=pltpu.CompilerParams(
            dimension_semantics=("parallel", "arbitrary"),
            vmem_limit_bytes=vmem,
        ),
        cost_estimate=cost,
    )(x2d, w_in_t)


# ----------------------------------------------------------------------------
# Attention kernels.  Query scale (hd**-0.5 * log2e) is folded into wq, so the
# kernels use exp2 (softmax is base-invariant) and never rescale activations.
# ----------------------------------------------------------------------------
def _attn_weights_kernel(q_ref, k_ref, v_ref, o_ref, w_ref, w_acc,
                         *, num_heads, head_dim):
    """Full-S step (need_weights=True): per-head softmax(QK^T)V plus the
    head-averaged weights accumulated in a VMEM scratch ref."""
    q = q_ref[...]                       # (TT, E)
    k = k_ref[...]                       # (S,  E)
    v = v_ref[...]                       # (S,  E)
    w_acc[...] = jnp.zeros_like(w_acc)   # (TT, S) f32

    # Static head loop: per-head slices are static lane windows of the E-major
    # tiles (no split-heads transpose ever hits HBM).
    # TODO(synk): for very large num_heads switch to lax.fori_loop + pl.ds lane
    # slices to bound unrolled code size.
    for h in range(num_heads):
        sl = slice(h * head_dim, (h + 1) * head_dim)
        s = lax.dot_general(q[:, sl], k[:, sl],
                            dimension_numbers=(((1,), (1,)), ((), ())),
                            preferred_element_type=jnp.float32)    # (TT, S)
        s = s - jnp.max(s, axis=-1, keepdims=True)
        e = jnp.exp2(s)
        p = e / jnp.sum(e, axis=-1, keepdims=True)   # exact divide (parity)
        w_acc[...] += p
        # dropout(p=0.0) is identity -> p used directly.
        o_ref[h] = jnp.dot(p.astype(v.dtype), v[:, sl],
                           preferred_element_type=jnp.float32
                           ).astype(o_ref.dtype)

    w_ref[...] = (w_acc[...] * (1.0 / num_heads)).astype(w_ref.dtype)


def _attn_flash_kernel(q_ref, k_ref, v_ref, o_ref, m_ref, l_ref, acc_ref,
                       *, num_heads, head_dim):
    """S-tiled online-softmax step (need_weights=False): K/V residency and f32
    temporaries bounded by the (TS, E) tile, independent of sequence length."""
    s_step = pl.program_id(2)

    @pl.when(s_step == 0)
    def _init():
        m_ref[...] = jnp.full_like(m_ref, -jnp.inf)
        l_ref[...] = jnp.zeros_like(l_ref)
        acc_ref[...] = jnp.zeros_like(acc_ref)

    q = q_ref[...]                       # (TT, E)
    k = k_ref[...]                       # (TS, E)
    v = v_ref[...]                       # (TS, E)

    for h in range(num_heads):
        sl = slice(h * head_dim, (h + 1) * head_dim)
        s = lax.dot_general(q[:, sl], k[:, sl],
                            dimension_numbers=(((1,), (1,)), ((), ())),
                            preferred_element_type=jnp.float32)    # (TT, TS)
        m_prev = m_ref[h]                                           # (TT, 1)
        m_new = jnp.maximum(m_prev, jnp.max(s, axis=-1, keepdims=True))
        alpha = jnp.exp2(m_prev - m_new)
        p = jnp.exp2(s - m_new)
        l_ref[h] = alpha * l_ref[h] + jnp.sum(p, axis=-1, keepdims=True)
        acc_ref[h] = alpha * acc_ref[h] + jnp.dot(
            p.astype(v.dtype), v[:, sl], preferred_element_type=jnp.float32)
        m_ref[h] = m_new

    @pl.when(s_step == pl.num_programs(2) - 1)
    def _finalize():
        o_ref[...] = (acc_ref[...] / l_ref[...]).astype(o_ref.dtype)


def attention_pallas(q_arr, k_arr, v_arr, slabs, *, num_heads,
                     need_weights=True, block_q=128, block_kv=512):
    """q_arr: (Qs, B, T, E); k_arr/v_arr: (Ks, B, S, E).  `slabs` are static
    slab indices (iq, ik, iv) selecting q/k/v inside each carrier array (all
    three may alias the fused (3, B, L, E) projection buffer).
    Returns ((B, H, T, hd), (B, T, S) | None)."""
    _, B, T, E = q_arr.shape
    S = k_arr.shape[2]
    H = num_heads
    hd = E // H
    iq, ik, iv = slabs
    dtype = q_arr.dtype
    itemsize = dtype.itemsize
    row_g = _row_granule(dtype)

    TT = _pick_tile(T, block_q, row_g)
    # v7x megacore: best effort to give both TensorCores parallel grid work.
    if B * (T // TT) < 2 and T // 2 >= row_g:
        tt2 = _pick_tile(T, T // 2, row_g)
        if T // tt2 >= 2:
            TT = tt2

    # NOTE: hd < 128 forces lane-partial output stores; the module's direct
    # .view(B, T, E) of the (B*H, T, hd) buffer pins this layout.
    o_shape = jax.ShapeDtypeStruct((B, H, T, hd), dtype)
    vmem = _vmem_limit_bytes()
    flops = 4 * B * T * S * E

    if need_weights:
        # Returning (B, T, S) weights forces a full-S softmax anyway, so K/V
        # stay resident for this path (chip-aware VMEM budget applies).
        grid = (B, T // TT)
        out = pl.pallas_call(
            functools.partial(_attn_weights_kernel, num_heads=H, head_dim=hd),
            out_shape=(o_shape, jax.ShapeDtypeStruct((B, T, S), dtype)),
            grid_spec=pltpu.PrefetchScalarGridSpec(
                num_scalar_prefetch=0,
                grid=grid,
                in_specs=[
                    pl.BlockSpec((None, None, TT, E),
                                 lambda b, t: (iq, b, t, 0)),
                    pl.BlockSpec((None, None, S, E),
                                 lambda b, t: (ik, b, 0, 0)),
                    pl.BlockSpec((None, None, S, E),
                                 lambda b, t: (iv, b, 0, 0)),
                ],
                out_specs=(
                    pl.BlockSpec((None, H, TT, hd), lambda b, t: (b, 0, t, 0)),
                    pl.BlockSpec((None, TT, S), lambda b, t: (b, t, 0)),
                ),
                scratch_shapes=[pltpu.VMEM((TT, S), jnp.float32)],
            ),
            compiler_params=pltpu.CompilerParams(
                dimension_semantics=("parallel", "parallel"),
                vmem_limit_bytes=vmem,
            ),
            cost_estimate=pl.CostEstimate(
                flops=flops, transcendentals=B * H * T * S,
                bytes_accessed=itemsize * (B * T * E
                                           + 2 * B * S * E * (T // TT)
                                           + B * T * E + B * T * S)),
        )(q_arr, k_arr, v_arr)
        return out[0], out[1]

    # need_weights=False: flash-style S tiling with online softmax.
    TS = _pick_tile(S, block_kv, row_g)
    grid = (B, T // TT, S // TS)
    out = pl.pallas_call(
        functools.partial(_attn_flash_kernel, num_heads=H, head_dim=hd),
        out_shape=o_shape,
        grid_spec=pltpu.PrefetchScalarGridSpec(
            num_scalar_prefetch=0,
            grid=grid,
            in_specs=[
                pl.BlockSpec((None, None, TT, E),
                             lambda b, t, s: (iq, b, t, 0)),
                pl.BlockSpec((None, None, TS, E),
                             lambda b, t, s: (ik, b, s, 0)),
                pl.BlockSpec((None, None, TS, E),
                             lambda b, t, s: (iv, b, s, 0)),
            ],
            out_specs=pl.BlockSpec((None, H, TT, hd),
                                   lambda b, t, s: (b, 0, t, 0)),
            scratch_shapes=[pltpu.VMEM((H, TT, 1), jnp.float32),
                            pltpu.VMEM((H, TT, 1), jnp.float32),
                            pltpu.VMEM((H, TT, hd), jnp.float32)],
        ),
        compiler_params=pltpu.CompilerParams(
            dimension_semantics=("parallel", "parallel", "arbitrary"),
            vmem_limit_bytes=vmem,
        ),
        cost_estimate=pl.CostEstimate(
            flops=flops, transcendentals=B * H * T * S,
            bytes_accessed=itemsize * (B * T * E * (S // TS)
                                       + 2 * B * S * E * (T // TT)
                                       + B * T * E)),
    )(q_arr, k_arr, v_arr)
    return out, None


# ----------------------------------------------------------------------------
# Module wrapper + one-time parameter preparation
# ----------------------------------------------------------------------------
def init_params(key, embed_dim, kdim, vdim):
    """PyTorch-layout parameters: weights (OUT, IN); bias only on out_proj
    (bias=True, add_bias_q=add_bias_kv=False)."""
    ks = jax.random.split(key, 5)
    scale = 1.0 / float(embed_dim) ** 0.5

    def w(k, out_d, in_d):
        return jax.random.uniform(k, (out_d, in_d), jnp.float32,
                                  minval=-1.0, maxval=1.0) * scale

    return {
        "wq": w(ks[0], embed_dim, embed_dim),
        "wk": w(ks[1], embed_dim, kdim),
        "wv": w(ks[2], embed_dim, vdim),
        "wo": w(ks[3], embed_dim, embed_dim),
        "bo": jax.random.uniform(ks[4], (embed_dim,), jnp.float32,
                                 minval=-1.0, maxval=1.0) * scale,
    }


def prepare_params(params, num_heads):
    """One-time parameter prep (hoisted out of the forward, per perf review):
      * fold head_dim**-0.5 * log2(e) into wq (kernels then use exp2; softmax
        is base-invariant, so results are unchanged),
      * transpose every weight to (IN, OUT) so the GEMM consumes MXU-native
        (K, N) tiles with no per-k-step transpose,
      * pre-concatenate the fused in-projection weight (in_dim, 3E)."""
    E = params["wo"].shape[0]
    hd = E // num_heads
    wq_scaled = params["wq"] * (float(hd) ** -0.5 * _LOG2E)
    prepped = {
        "wq_t": wq_scaled.T,
        "wk_t": params["wk"].T,
        "wv_t": params["wv"].T,
        "wo_t": params["wo"].T,
        "bo": params["bo"],
    }
    in_dims = {params["wq"].shape[1], params["wk"].shape[1],
               params["wv"].shape[1]}
    if len(in_dims) == 1:
        prepped["w_in_t"] = jnp.concatenate(
            [wq_scaled, params["wk"], params["wv"]], axis=0).T   # (in, 3E)
    return prepped


def multihead_attention_transparent(query, key, value, params, num_heads,
                                    need_weights=True, *,
                                    attn_block_q=128, attn_block_kv=512):
    """query: (B, T, E); key: (B, S, kdim); value: (B, S, vdim).
    `params` must come from prepare_params()."""
    B, T, E = query.shape
    S = key.shape[1]

    # In-projections (no q/k/v bias).  Self-attention (same tensor) + matching
    # input dims -> one fused GEMM reading the activation once and writing a
    # (3, B*T, E) slab buffer consumed directly by the attention BlockSpecs
    # (no XLA slice/copy).  NOTE: the fast path is gated on object identity;
    # three distinct-but-equal tensors fall back to separate projections
    # (numerically identical, just 3x activation reads).
    same_input = (query is key) and (key is value)
    if same_input and "w_in_t" in params:
        qkv = fused_qkv_projection(query.reshape(B * T, -1),
                                   params["w_in_t"], E)          # (3, B*T, E)
        qkv = qkv.reshape(3, B, T, E)                             # free reshape
        q_arr = k_arr = v_arr = qkv
        slabs = (0, 1, 2)
    else:
        q_arr = linear_pallas(query.reshape(B * T, -1),
                              params["wq_t"]).reshape(1, B, T, E)
        k_arr = linear_pallas(key.reshape(B * S, -1),
                              params["wk_t"]).reshape(1, B, S, E)
        v_arr = linear_pallas(value.reshape(B * S, -1),
                              params["wv_t"]).reshape(1, B, S, E)
        slabs = (0, 0, 0)

    attn_out, attn_w = attention_pallas(
        q_arr, k_arr, v_arr, slabs, num_heads=num_heads,
        need_weights=need_weights, block_q=attn_block_q,
        block_kv=attn_block_kv)

    # Reference does attn_output.contiguous().view(bsz, tgt_len, embed_dim)
    # DIRECTLY on the (B*H, T, hd) buffer; our (B, H, T, hd) row-major output
    # has the identical flat layout, so this reshape is a free bitcast.
    concat_output = attn_out.reshape(B, T, E)

    total_output = linear_pallas(concat_output.reshape(B * T, E),
                                 params["wo_t"], params["bo"]).reshape(B, T, E)
    return total_output, attn_w


# Pure-JAX reference (mirrors the PyTorch forward) for a silent check.
def _reference(query, key, value, raw_params, num_heads):
    B, T, E = query.shape
    S = key.shape[1]
    H, hd = num_heads, E // num_heads
    q = query @ raw_params["wq"].T
    k = key @ raw_params["wk"].T
    v = value @ raw_params["wv"].T
    q = q * (float(hd) ** -0.5)
    sh = lambda x, L: (x.reshape(B, L, H, hd).transpose(0, 2, 1, 3)
                       .reshape(B * H, L, hd))
    qh, kh, vh = sh(q, T), sh(k, S), sh(v, S)
    s = jnp.einsum("btd,bsd->bts", qh, kh)
    p = jax.nn.softmax(s, axis=-1)
    o = jnp.einsum("bts,bsd->btd", p, vh)
    out = o.reshape(B, T, E) @ raw_params["wo"].T + raw_params["bo"]
    return out, p.reshape(B, H, T, S).sum(axis=1) / H


if __name__ == "__main__":
    configs = [
        # (B, T, S, E, H): E=32 exercises the small-E fused projection kernel
        # (hd=8); E=128 exercises the 128-lane-aligned tiled fused path (hd=32).
        (2, 8, 16, 32, 4),
        (2, 8, 16, 128, 4),
    ]
    tol = dict(atol=1e-2, rtol=1e-2)
    for (B, T, S, E, H) in configs:
        root = jax.random.PRNGKey(0)
        k_x, k_k, k_v, k_p = jax.random.split(root, 4)
        raw = init_params(k_p, E, E, E)
        params = prepare_params(raw, H)

        x = jax.random.normal(k_x, (B, T, E), jnp.float32)
        key_t = jax.random.normal(k_k, (B, S, E), jnp.float32)
        val_t = jax.random.normal(k_v, (B, S, E), jnp.float32)

        # 1) self-attention, need_weights=True (fused in-proj + full-S kernel)
        out_sa, w_sa = multihead_attention_transparent(x, x, x, params, H)
        # 2) cross-attention, need_weights=True (separate projections, S != T)
        out_ca, w_ca = multihead_attention_transparent(
            x, key_t, val_t, params, H)
        # 3) cross-attention, need_weights=False (flash path, 2 KV tiles)
        out_nw, w_nw = multihead_attention_transparent(
            x, key_t, val_t, params, H, need_weights=False, attn_block_kv=8)
        # 4) self-attention, need_weights=False (fused in-proj + flash path)
        out_sf, w_sf = multihead_attention_transparent(
            x, x, x, params, H, need_weights=False)
        jax.block_until_ready((out_sa, w_sa, out_ca, w_ca, out_nw, out_sf))

        ref_sa, ref_w_sa = _reference(x, x, x, raw, H)
        ref_ca, ref_w_ca = _reference(x, key_t, val_t, raw, H)

        assert out_sa.shape == (B, T, E) and w_sa.shape == (B, T, T)
        assert out_ca.shape == (B, T, E) and w_ca.shape == (B, T, S)
        assert w_nw is None and w_sf is None
        assert jnp.allclose(out_sa, ref_sa, **tol)
        assert jnp.allclose(w_sa, ref_w_sa, **tol)
        assert jnp.allclose(out_ca, ref_ca, **tol)
        assert jnp.allclose(w_ca, ref_w_ca, **tol)
        assert jnp.allclose(out_nw, ref_ca, **tol)
        assert jnp.allclose(out_sf, ref_sa, **tol)

    print("KERNEL_OK")
</pallas_src>

<mosaic_0001>
module attributes {stable_mosaic.version = 11 : i64} {
  func.func @_fused_qkv_small_kernel(%arg0: i32, %arg1: i32, %arg2: memref<16x32xf32, #tpu.memory_space<vmem>>, %arg3: memref<32x96xf32, #tpu.memory_space<vmem>>, %arg4: memref<3x16x32xf32, #tpu.memory_space<vmem>>, %arg5: memref<16x96xf32, #tpu.memory_space<vmem>>) attributes {dimension_semantics = [#tpu.dimension_semantics<parallel>, #tpu.dimension_semantics<arbitrary>], iteration_bounds = array<i64: 1, 1>, scalar_prefetch = 0 : i64, scratch_operands = 1 : i64, tpu.core_type = #tpu.core_type<tc>, window_params = [{transform_indices = @transform_0, window_bounds = array<i64: 16, 32>}, {transform_indices = @transform_1, window_bounds = array<i64: 32, 96>}, {transform_indices = @transform_2, window_bounds = array<i64: 3, 16, 32>}]} {
    %c0_i32 = arith.constant 0 : i32
    %0 = arith.cmpi eq, %arg1, %c0_i32 : i32
    %1 = arith.extui %0 : i1 to i32
    %c0_i32_0 = arith.constant 0 : i32
    %2 = arith.cmpi ne, %1, %c0_i32_0 : i32
    scf.if %2 {
      %cst_10 = arith.constant 0.000000e+00 : f32
      %12 = vector.broadcast %cst_10 : f32 to vector<16x96xf32>
      %c0_11 = arith.constant 0 : index
      %c0_12 = arith.constant 0 : index
      %13 = vector.load %arg5[%c0_11, %c0_12] : memref<16x96xf32, #tpu.memory_space<vmem>>, vector<16x96xf32>
      tpu.vector_store %arg5[%c0_11, %c0_12], %12 {strides = array<i32>} : memref<16x96xf32, #tpu.memory_space<vmem>>, vector<16x96xf32>,
    } else {
    }
    %c0 = arith.constant 0 : index
    %c0_1 = arith.constant 0 : index
    %3 = vector.load %arg5[%c0, %c0_1] : memref<16x96xf32, #tpu.memory_space<vmem>>, vector<16x96xf32>
    %c0_2 = arith.constant 0 : index
    %c0_3 = arith.constant 0 : index
    %4 = vector.load %arg2[%c0_2, %c0_3] : memref<16x32xf32, #tpu.memory_space<vmem>>, vector<16x32xf32>
    %c0_4 = arith.constant 0 : index
    %c0_5 = arith.constant 0 : index
    %5 = vector.load %arg3[%c0_4, %c0_5] : memref<32x96xf32, #tpu.memory_space<vmem>>, vector<32x96xf32>
    %cst = arith.constant dense<0.000000e+00> : vector<16x96xf32>
    %6 = tpu.matmul %4, %5, %cst {dimension_numbers = #tpu.dot_dimension_numbers<[1], [0], [0], [1], [0, 0, 1, 1], [], []>} : vector<16x32xf32>, vector<32x96xf32>, vector<16x96xf32> -> vector<16x96xf32>
    %7 = arith.addf %3, %6 : vector<16x96xf32>
    %c0_6 = arith.constant 0 : index
    %c0_7 = arith.constant 0 : index
    %8 = vector.load %arg5[%c0_6, %c0_7] : memref<16x96xf32, #tpu.memory_space<vmem>>, vector<16x96xf32>
    tpu.vector_store %arg5[%c0_6, %c0_7], %7 {strides = array<i32>} : memref<16x96xf32, #tpu.memory_space<vmem>>, vector<16x96xf32>,
    %c0_i32_8 = arith.constant 0 : i32
    %9 = arith.cmpi eq, %arg1, %c0_i32_8 : i32
    %10 = arith.extui %9 : i1 to i32
    %c0_i32_9 = arith.constant 0 : i32
    %11 = arith.cmpi ne, %10, %c0_i32_9 : i32
    scf.if %11 {
      %c0_10 = arith.constant 0 : index
      %c0_11 = arith.constant 0 : index
      %12 = vector.load %arg5[%c0_10, %c0_11] : memref<16x96xf32, #tpu.memory_space<vmem>>, vector<16x96xf32>
      %13 = vector.extract_strided_slice %12 {offsets = [0, 0], sizes = [16, 32], strides = [1, 1]} : vector<16x96xf32> to vector<16x32xf32>
      %c0_12 = arith.constant 0 : index
      %c0_13 = arith.constant 0 : index
      %c0_14 = arith.constant 0 : index
      %14 = vector.load %arg4[%c0_12, %c0_13, %c0_14] : memref<3x16x32xf32, #tpu.memory_space<vmem>>, vector<1x16x32xf32>
      %15 = vector.shape_cast %14 : vector<1x16x32xf32> to vector<16x32xf32>
      %16 = vector.shape_cast %13 : vector<16x32xf32> to vector<1x16x32xf32>
      tpu.vector_store %arg4[%c0_12, %c0_13, %c0_14], %16 {strides = array<i32>} : memref<3x16x32xf32, #tpu.memory_space<vmem>>, vector<1x16x32xf32>,
      %17 = vector.extract_strided_slice %12 {offsets = [0, 32], sizes = [16, 32], strides = [1, 1]} : vector<16x96xf32> to vector<16x32xf32>
      %c1 = arith.constant 1 : index
      %c0_15 = arith.constant 0 : index
      %c0_16 = arith.constant 0 : index
      %18 = vector.load %arg4[%c1, %c0_15, %c0_16] : memref<3x16x32xf32, #tpu.memory_space<vmem>>, vector<1x16x32xf32>
      %19 = vector.shape_cast %18 : vector<1x16x32xf32> to vector<16x32xf32>
      %20 = vector.shape_cast %17 : vector<16x32xf32> to vector<1x16x32xf32>
      tpu.vector_store %arg4[%c1, %c0_15, %c0_16], %20 {strides = array<i32>} : memref<3x16x32xf32, #tpu.memory_space<vmem>>, vector<1x16x32xf32>,
      %21 = vector.extract_strided_slice %12 {offsets = [0, 64], sizes = [16, 32], strides = [1, 1]} : vector<16x96xf32> to vector<16x32xf32>
      %c2 = arith.constant 2 : index
      %c0_17 = arith.constant 0 : index
      %c0_18 = arith.constant 0 : index
      %22 = vector.load %arg4[%c2, %c0_17, %c0_18] : memref<3x16x32xf32, #tpu.memory_space<vmem>>, vector<1x16x32xf32>
      %23 = vector.shape_cast %22 : vector<1x16x32xf32> to vector<16x32xf32>
      %24 = vector.shape_cast %21 : vector<16x32xf32> to vector<1x16x32xf32>
      tpu.vector_store %arg4[%c2, %c0_17, %c0_18], %24 {strides = array<i32>} : memref<3x16x32xf32, #tpu.memory_space<vmem>>, vector<1x16x32xf32>,
    } else {
    }
    return
  }
  func.func @transform_0(%arg0: i32, %arg1: i32) -> (i32, i32) {
    %c0_i32 = arith.constant 0 : i32
    return %arg0, %arg1 : i32, i32
  }
  func.func @transform_1(%arg0: i32, %arg1: i32) -> (i32, i32) {
    %c0_i32 = arith.constant 0 : i32
    %c0_i32_0 = arith.constant 0 : i32
    return %arg1, %c0_i32 : i32, i32
  }
  func.func @transform_2(%arg0: i32, %arg1: i32) -> (i32, i32, i32) {
    %c0_i32 = arith.constant 0 : i32
    %c0_i32_0 = arith.constant 0 : i32
    %c0_i32_1 = arith.constant 0 : i32
    return %c0_i32, %arg0, %c0_i32_0 : i32, i32, i32
  }
}

</mosaic_0001>

<llo_original>
// kernel: tpu_custom_call.1
$region0: #{tpu_custom_call.1}
  #allocation0 [shape = 'u32[]', space=smem, size = 0x4, offset = 0x4, fixed_abs, tag = 'smem constant byte address 0x4 - core index']
  #allocation1 [shape = 'u32[72,128]{1,0:T(1,128)}', space=vmem, size = 0x9000, scoped, tag = 'internal scratch']
  #allocation2 [shape = 'f32[16,96]{1,0:T(8,128)}', space=vmem, size = 0x2000, scoped, tag = 'scratch operand']
  %s0 = inlined_call_operand.hbm [shape: f32[16,32], index: 0, kind: input, shape index: {}]
  %s1 = inlined_call_operand.hbm [shape: f32[32,96], index: 1, kind: input, shape index: {}]
  %s2 = inlined_call_operand.hbm [shape: f32[3,16,32], index: 2, kind: output, shape index: {}]
  %s3 = sld [smem:[#allocation0]]
  $region34: #{tpu_custom_call.1} parent=0
    _
  %s5 = ssub.s32 1, %s3
  %s6 = scalar_select 0, %s5, %s3
  $region1: #{tpu_custom_call.1} parent=0
    #allocation3 [shape = 'u8[8192]{0}', space=vmem, size = 0x2000, scoped, tag = 'input window, operand 0, single buffered']
    #allocation4 [shape = 's32[1]{0}', space=sflag, size = 0x4, scoped, tag = 'scoped memory for tpu_custom_call.1']
    #allocation5 [shape = 's32[1]{0}', space=sflag, size = 0x4, scoped, tag = 'scoped memory for tpu_custom_call.1']
    #allocation6 [shape = 'u8[16384]{0}', space=vmem, size = 0x4000, scoped, tag = 'input window, operand 1, single buffered']
    #allocation7 [shape = 's32[1]{0}', space=sflag, size = 0x4, scoped, tag = 'scoped memory for tpu_custom_call.1']
    #allocation8 [shape = 'u8[24576]{0}', space=vmem, size = 0x6000, scoped, tag = 'output window, operand 0, single buffered']
    %7 = vsyncpa [#allocation4], 0
    %8 = vsyncpa [#allocation7], 0
    %9 = vsyncpa [#allocation5], 0
    // Predicated region
    $region2: #{tpu_custom_call.1} parent=1 // pred_check
      _
    $region3: #{tpu_custom_call.1} parent=1 // pred_check_branch
      %11 = sbr.rel (0) target = $region5
    $region4: #{tpu_custom_call.1} parent=1 // pred_region
      %13 = vsyncadd [#allocation4], 0
      %s14 = sshll.u32 %s0, 4
      %s15 = int_to_ptr.hbm [resolvable:$true] %s14
      %s16 = sshll.u32 [#allocation3], 4
      %s17 = int_to_ptr.vmem [resolvable:$true] %s16
      %22 = dma.hbm_to_vmem [thread:$0]  %s15, 256, %s17, [#allocation4], 128, 128, 8
    $region5: #{tpu_custom_call.1} parent=1 // pred_fallthru
      _
    // Predicated region
    $region6: #{tpu_custom_call.1} parent=1 // pred_check
      _
    $region7: #{tpu_custom_call.1} parent=1 // pred_check_branch
      %24 = sbr.rel (0) target = $region9
    $region8: #{tpu_custom_call.1} parent=1 // pred_region
      %26 = vsyncadd [#allocation7], 0
      %s27 = sshll.u32 %s1, 4
      %s28 = int_to_ptr.hbm [resolvable:$true] %s27
      %s29 = sshll.u32 [#allocation6], 4
      %s30 = int_to_ptr.vmem [resolvable:$true] %s29
      %35 = dma.hbm_to_vmem [thread:$0]  %s28, 512, %s30, [#allocation7], 128, 128, 8
    $region9: #{tpu_custom_call.1} parent=1 // pred_fallthru
      _
    // Predicated region
    $region10: #{tpu_custom_call.1} parent=1 // pred_check
      _
    $region11: #{tpu_custom_call.1} parent=1 // pred_check_branch
      %37 = sbr.rel (0) target = $region13
    $region12: #{tpu_custom_call.1} parent=1 // pred_region
      %39 = dma.done [#allocation4], 256
    $region13: #{tpu_custom_call.1} parent=1 // pred_fallthru
      _
    // Predicated region
    $region14: #{tpu_custom_call.1} parent=1 // pred_check
      _
    $region15: #{tpu_custom_call.1} parent=1 // pred_check_branch
      %41 = sbr.rel (0) target = $region17
    $region16: #{tpu_custom_call.1} parent=1 // pred_region
      %43 = dma.done [#allocation7], 512
    $region17: #{tpu_custom_call.1} parent=1 // pred_fallthru
      _
    %p44 = scmp.eq.s32.totalorder 0, 0
    // Predicated region
    $region18: #{tpu_custom_call.1} parent=1 // pred_check
      %p45 = pneg %p44
    $region19: #{tpu_custom_call.1} parent=1 // pred_check_branch
      %47 = sbr.rel (%p45) target = $region21
    $region20: #{tpu_custom_call.1} parent=1 // pred_region
      %vm48 = vcmask 785408
      %49 = vst.msk [vmem:[#allocation2] sm:$0xff] %vm48, 0.0
      %50 = vst.msk [vmem:[#allocation2 + $0x8] sm:$0xff] %vm48, 0.0
    $region21: #{tpu_custom_call.1} parent=1 // pred_fallthru
      _
    %v51 = vld [vmem:[#allocation2] sm:$0xff]
    %v52 = vld [vmem:[#allocation2 + $0x8] sm:$0xff]
    %v53 = vld [vmem:[#allocation3] sm:$0xff]
    %v54 = vld [vmem:[#allocation3 + $0x8] sm:$0xff]
    %v55 = vld [vmem:[#allocation6] sm:$0xff]
    %v56 = vld [vmem:[#allocation6 + $0x8] sm:$0xff]
    %v57 = vld [vmem:[#allocation6 + $0x10] sm:$0xff]
    %v58 = vld [vmem:[#allocation6 + $0x18] sm:$0xff]
    %vm59 = vcmask 261120
    %v61 = vsel %vm59, %v53, 0
    %v64 = vsel %vm59, %v54, 0
    %66 = vmatpush.msra.mxu0 0.0
    %67 = vmatpush.msra.mxu0 0.0
    %68 = vmatpush.msra.mxu0 0.0
    %69 = vmatpush.msra.mxu0 0.0
    %70 = vmatpush.msra.mxu0 0.0
    %71 = vmatpush.msra.mxu0 0.0
    %72 = vmatpush.msra.mxu0 0.0
    %73 = vmatpush.msra.mxu0 0.0
    %74 = vmatpush.msra.mxu0 0.0
    %75 = vmatpush.msra.mxu0 0.0
    %76 = vmatpush.msra.mxu0 0.0
    %77 = vmatpush.msra.mxu0 0.0
    %78 = vmatpush.msra.mxu0 %v58
    %79 = vmatpush.msra.mxu0 %v57
    %80 = vmatpush.msra.mxu0 %v56
    %81 = vmatpush.msra.mxu0 %v55
    %82 = vmatmul.f32.gmra.mxu0 %v61
    %v83 = vpop.f32.mrf.mxu0
    %v84 = vadd.f32 0.0, %v83
    %85 = vmatmul.f32.gmra.mxu0 %v64
    %v86 = vpop.f32.mrf.mxu0
    %v87 = vadd.f32 0.0, %v86
    %88 = vdwg.mxu0
    %v89 = vadd.f32 %v51, %v84
    %v90 = vadd.f32 %v52, %v87
    %vm91 = vcmask 785408
    %92 = vst.msk [vmem:[#allocation2] sm:$0xff] %vm91, %v89
    %93 = vst.msk [vmem:[#allocation2 + $0x8] sm:$0xff] %vm91, %v90
    // Predicated region
    $region22: #{tpu_custom_call.1} parent=1 // pred_check
      %p94 = pneg %p44
    $region23: #{tpu_custom_call.1} parent=1 // pred_check_branch
      %96 = sbr.rel (%p94) target = $region25
    $region24: #{tpu_custom_call.1} parent=1 // pred_region
      %v97 = vld [vmem:[#allocation2] sm:$0xff]
      %v98 = vld [vmem:[#allocation2 + $0x8] sm:$0xff]
      %99 = vst.msk [vmem:[#allocation8] sm:$0xff] %vm59, %v97
      %100 = vst.msk [vmem:[#allocation8 + $0x8] sm:$0xff] %vm59, %v98
      %103 = vrot.lane.b32.xlu0 %v97, 96
      %v104 = vpop.permute.xlu0 %103
      %105 = vrot.lane.b32.xlu0 %v98, 96
      %v106 = vpop.permute.xlu0 %105
      %s109 = scalar_lea.vmem [#allocation8], 16
      %110 = vst.msk [vmem:[%s109] sm:$0xff] %vm59, %v104
      %111 = vst.msk [vmem:[%s109 + $0x8] sm:$0xff] %vm59, %v106
      %112 = vrot.lane.b32.xlu0 %v97, 64
      %v113 = vpop.permute.xlu0 %112
      %114 = vrot.lane.b32.xlu0 %v98, 64
      %v115 = vpop.permute.xlu0 %114
      %s118 = scalar_lea.vmem [#allocation8], 32
      %119 = vst.msk [vmem:[%s118] sm:$0xff] %vm59, %v113
      %120 = vst.msk [vmem:[%s118 + $0x8] sm:$0xff] %vm59, %v115
    $region25: #{tpu_custom_call.1} parent=1 // pred_fallthru
      _
    // Predicated region
    $region26: #{tpu_custom_call.1} parent=1 // pred_check
      _
    $region27: #{tpu_custom_call.1} parent=1 // pred_check_branch
      %122 = sbr.rel (0) target = $region29
    $region28: #{tpu_custom_call.1} parent=1 // pred_region
      %124 = vsyncadd [#allocation5], 0
      %s125 = sshll.u32 [#allocation8], 4
      %s126 = int_to_ptr.vmem [resolvable:$true] %s125
      %s127 = sshll.u32 %s2, 4
      %s128 = int_to_ptr.hbm [resolvable:$true] %s127
      %133 = dma.vmem_to_hbm [thread:$0]  %s126, 768, %s128, [#allocation5], 128, 128, 8
    $region29: #{tpu_custom_call.1} parent=1 // pred_fallthru
      _
    // Predicated region
    $region30: #{tpu_custom_call.1} parent=1 // pred_check
      _
    $region31: #{tpu_custom_call.1} parent=1 // pred_check_branch
      %135 = sbr.rel (0) target = $region33
    $region32: #{tpu_custom_call.1} parent=1 // pred_region
      %137 = dma.done [#allocation5], 768
    $region33: #{tpu_custom_call.1} parent=1 // pred_fallthru
      _
    %138 = vsyncpa [#allocation4], 1
    %139 = vsyncpa [#allocation7], 1
    %140 = vsyncpa [#allocation5], 1

</llo_original>
